<compile_context>
chip_gen: v5e
topology: v5e:2x2
jax: 0.10.0
libtpu: 0.0.40
codegen_flags: <defaults>
</compile_context>

<pallas_src>
import functools

import jax
import jax.numpy as jnp
from jax import lax
from jax.experimental import pallas as pl
from jax.experimental.pallas import tpu as pltpu

_LANE = 128


def _self_attention_kernel(x_ref, wqkv_ref, o_ref, *, d_pad, scale):
    x = x_ref[...]          # (S, d_in)   f32
    w_qkv = wqkv_ref[...]   # (d_in, 3*d_pad) f32  (Q | K | V, each zero-padded)

    # Single fused projection: (S, d_in) @ (d_in, 3*d_pad) -> (S, 3*d_pad).
    qkv = jnp.dot(x, w_qkv, preferred_element_type=jnp.float32)

    # Lane-aligned 128-wide slices (d_pad is a multiple of 128).
    q = qkv[:, :d_pad] * scale           # fold 1/sqrt(d_out) into Q
    k = qkv[:, d_pad:2 * d_pad]
    v = qkv[:, 2 * d_pad:]

    # scores = Q @ K^T, expressed without an explicit transpose: contract the
    # last dim of both operands so Mosaic feeds the MXU directly.
    scores = lax.dot_general(
        q, k,
        dimension_numbers=(((1,), (1,)), ((), ())),
        preferred_element_type=jnp.float32)          # (S, S)

    # Numerically-stable softmax along the last axis.
    m = jnp.max(scores, axis=-1, keepdims=True)
    p = jnp.exp(scores - m)
    denom = jnp.sum(p, axis=-1, keepdims=True)
    inv = pl.reciprocal(denom, approx=True)          # EUP vrcp (free slot)
    inv = inv * (2.0 - denom * inv)                  # one NR step -> f32 accuracy
    attn = p * inv                                   # (S, S)

    ctx = jnp.dot(attn, v, preferred_element_type=jnp.float32)   # (S, d_pad)
    o_ref[...] = ctx.astype(o_ref.dtype)


def self_attention_v1(x, w_query, w_key, w_value):
    """Pallas TPU forward of SelfAttention_v1.

    x: (seq, d_in) float32
    w_query / w_key / w_value: (d_in, d_out) float32
    returns: (seq, d_out) float32
    """
    seq, d_in = x.shape
    d_out = w_query.shape[1]

    # Pad head width up to a lane-dense multiple of 128 (zeros). Zero columns
    # contribute nothing to the Q.K contraction and are sliced off the output.
    d_pad = max(_LANE, -(-d_out // _LANE) * _LANE)
    pad = d_pad - d_out

    def _padw(w):
        return jnp.pad(w, ((0, 0), (0, pad))) if pad else w

    # Fused QKV weight slab: (d_in, 3*d_pad). In a real model this would be
    # stored pre-fused; here it is built once per call in the wrapper.
    w_qkv = jnp.concatenate([_padw(w_query), _padw(w_key), _padw(w_value)],
                            axis=1)

    scale = 1.0 / (float(d_out) ** 0.5)
    kernel = functools.partial(_self_attention_kernel, d_pad=d_pad, scale=scale)

    cost = pl.CostEstimate(
        flops=2 * seq * d_in * 3 * d_pad + 4 * seq * seq * d_pad,
        transcendentals=seq * seq + seq,
        bytes_accessed=4 * (seq * d_in + d_in * 3 * d_pad + seq * d_pad),
    )

    out_padded = pl.pallas_call(
        kernel,
        out_shape=jax.ShapeDtypeStruct((seq, d_pad), x.dtype),
        in_specs=[
            pl.BlockSpec((seq, d_in), lambda: (0, 0)),
            pl.BlockSpec((d_in, 3 * d_pad), lambda: (0, 0)),
        ],
        out_specs=pl.BlockSpec((seq, d_pad), lambda: (0, 0)),
        cost_estimate=cost,
    )(x, w_qkv)

    return out_padded[:, :d_out]


def _reference(x, w_query, w_key, w_value):
    queries = x @ w_query
    keys = x @ w_key
    values = x @ w_value
    scores = queries @ keys.T
    weights = jax.nn.softmax(scores / (keys.shape[-1] ** 0.5), axis=-1)
    return weights @ values


if __name__ == "__main__":
    # Small shapes consistent with the module: x is (seq, d_in).
    seq, d_in, d_out = 8, 16, 32

    key = jax.random.PRNGKey(0)
    kx, kq, kk, kv = jax.random.split(key, 4)

    x = jax.random.normal(kx, (seq, d_in), dtype=jnp.float32)
    # nn.Parameter(torch.rand(d_in, d_out)) -> uniform [0, 1)
    w_query = jax.random.uniform(kq, (d_in, d_out), dtype=jnp.float32)
    w_key = jax.random.uniform(kk, (d_in, d_out), dtype=jnp.float32)
    w_value = jax.random.uniform(kv, (d_in, d_out), dtype=jnp.float32)

    out = self_attention_v1(x, w_query, w_key, w_value)
    out = jax.block_until_ready(out)

    ref = _reference(x, w_query, w_key, w_value)
    assert out.shape == (seq, d_out)
    assert jnp.allclose(out, ref, atol=1e-5, rtol=1e-5), "mismatch vs reference"

    print("KERNEL_OK")
</pallas_src>

<mosaic_0001>
module attributes {stable_mosaic.version = 11 : i64} {
  func.func @_self_attention_kernel(%arg0: memref<8x16xf32, #tpu.memory_space<vmem>>, %arg1: memref<16x384xf32, #tpu.memory_space<vmem>>, %arg2: memref<8x128xf32, #tpu.memory_space<vmem>>) attributes {dimension_semantics = [], scalar_prefetch = 0 : i64, scratch_operands = 0 : i64, tpu.core_type = #tpu.core_type<tc>} {
    %c0 = arith.constant 0 : index
    %c0_0 = arith.constant 0 : index
    %0 = vector.load %arg0[%c0, %c0_0] : memref<8x16xf32, #tpu.memory_space<vmem>>, vector<8x16xf32>
    %c0_1 = arith.constant 0 : index
    %c0_2 = arith.constant 0 : index
    %1 = vector.load %arg1[%c0_1, %c0_2] : memref<16x384xf32, #tpu.memory_space<vmem>>, vector<16x384xf32>
    %cst = arith.constant dense<0.000000e+00> : vector<8x384xf32>
    %2 = tpu.matmul %0, %1, %cst {dimension_numbers = #tpu.dot_dimension_numbers<[1], [0], [0], [1], [0, 0, 1, 1], [], []>} : vector<8x16xf32>, vector<16x384xf32>, vector<8x384xf32> -> vector<8x384xf32>
    %3 = vector.extract_strided_slice %2 {offsets = [0, 0], sizes = [8, 128], strides = [1, 1]} : vector<8x384xf32> to vector<8x128xf32>
    %cst_3 = arith.constant 0.176776692 : f32
    %4 = vector.broadcast %cst_3 : f32 to vector<8x128xf32>
    %5 = arith.mulf %3, %4 : vector<8x128xf32>
    %6 = vector.extract_strided_slice %2 {offsets = [0, 128], sizes = [8, 128], strides = [1, 1]} : vector<8x384xf32> to vector<8x128xf32>
    %7 = vector.extract_strided_slice %2 {offsets = [0, 256], sizes = [8, 128], strides = [1, 1]} : vector<8x384xf32> to vector<8x128xf32>
    %cst_4 = arith.constant dense<0.000000e+00> : vector<8x8xf32>
    %8 = tpu.matmul %5, %6, %cst_4 {dimension_numbers = #tpu.dot_dimension_numbers<[1], [1], [0], [0], [0, 0, 1, 0], [], []>} : vector<8x128xf32>, vector<8x128xf32>, vector<8x8xf32> -> vector<8x8xf32>
    %cst_5 = arith.constant dense<0xFF800000> : vector<8xf32>
    %9 = vector.multi_reduction <maximumf>, %8, %cst_5 [1] : vector<8x8xf32> to vector<8xf32>
    %10 = vector.shape_cast %9 : vector<8xf32> to vector<8x1xf32>
    %11 = vector.broadcast %10 : vector<8x1xf32> to vector<8x8xf32>
    %12 = arith.subf %8, %11 : vector<8x8xf32>
    %13 = math.exp %12 : vector<8x8xf32>
    %cst_6 = arith.constant dense<0.000000e+00> : vector<8xf32>
    %14 = vector.multi_reduction <add>, %13, %cst_6 [1] : vector<8x8xf32> to vector<8xf32>
    %15 = vector.shape_cast %14 : vector<8xf32> to vector<8x1xf32>
    %16 = tpu.reciprocal %15 {approx = true} : vector<8x1xf32> -> vector<8x1xf32>
    %17 = arith.mulf %15, %16 : vector<8x1xf32>
    %cst_7 = arith.constant 2.000000e+00 : f32
    %18 = vector.broadcast %cst_7 : f32 to vector<8x1xf32>
    %19 = arith.subf %18, %17 : vector<8x1xf32>
    %20 = arith.mulf %16, %19 : vector<8x1xf32>
    %21 = vector.broadcast %20 : vector<8x1xf32> to vector<8x8xf32>
    %22 = arith.mulf %13, %21 : vector<8x8xf32>
    %cst_8 = arith.constant dense<0.000000e+00> : vector<8x128xf32>
    %23 = tpu.matmul %22, %7, %cst_8 {dimension_numbers = #tpu.dot_dimension_numbers<[1], [0], [0], [1], [0, 0, 1, 1], [], []>} : vector<8x8xf32>, vector<8x128xf32>, vector<8x128xf32> -> vector<8x128xf32>
    %c0_9 = arith.constant 0 : index
    %c0_10 = arith.constant 0 : index
    %24 = vector.load %arg2[%c0_9, %c0_10] : memref<8x128xf32, #tpu.memory_space<vmem>>, vector<8x128xf32>
    tpu.vector_store %arg2[%c0_9, %c0_10], %23 {strides = array<i32>} : memref<8x128xf32, #tpu.memory_space<vmem>>, vector<8x128xf32>,
    return
  }
}

</mosaic_0001>

<llo_original>
// kernel: tpu_custom_call.1
$region0: #{tpu_custom_call.1}
  #allocation0 [shape = 'u32[]', space=smem, size = 0x4, offset = 0x4, fixed_abs, tag = 'smem constant byte address 0x4 - core index']
  #allocation1 [shape = 'u32[72,128]{1,0:T(1,128)}', space=vmem, size = 0x9000, scoped, tag = 'internal scratch']
  %s0 = inlined_call_operand.hbm [shape: f32[8,16], index: 0, kind: input, shape index: {}]
  %s1 = inlined_call_operand.hbm [shape: f32[16,384], index: 1, kind: input, shape index: {}]
  %s2 = inlined_call_operand.hbm [shape: f32[8,128], index: 2, kind: output, shape index: {}]
  %s3 = sld [smem:[#allocation0]]
  $region26: #{tpu_custom_call.1} parent=0
    _
  %s5 = ssub.s32 1, %s3
  %s6 = scalar_select 0, %s5, %s3
  $region1: #{tpu_custom_call.1} parent=0
    #allocation2 [shape = 'u8[4096]{0}', space=vmem, size = 0x1000, scoped, tag = 'input window, operand 0, single buffered']
    #allocation3 [shape = 's32[1]{0}', space=sflag, size = 0x4, scoped, tag = 'scoped memory for tpu_custom_call.1']
    #allocation4 [shape = 's32[1]{0}', space=sflag, size = 0x4, scoped, tag = 'scoped memory for tpu_custom_call.1']
    #allocation5 [shape = 'u8[24576]{0}', space=vmem, size = 0x6000, scoped, tag = 'input window, operand 1, single buffered']
    #allocation6 [shape = 's32[1]{0}', space=sflag, size = 0x4, scoped, tag = 'scoped memory for tpu_custom_call.1']
    #allocation7 [shape = 'u8[4096]{0}', space=vmem, size = 0x1000, scoped, tag = 'output window, operand 0, single buffered']
    %7 = vsyncpa [#allocation3], 0
    %8 = vsyncpa [#allocation6], 0
    %9 = vsyncpa [#allocation4], 0
    // Predicated region
    $region2: #{tpu_custom_call.1} parent=1 // pred_check
      _
    $region3: #{tpu_custom_call.1} parent=1 // pred_check_branch
      %11 = sbr.rel (0) target = $region5
    $region4: #{tpu_custom_call.1} parent=1 // pred_region
      %13 = vsyncadd [#allocation3], 0
      %s15 = sshll.u32 %s0, 4
      %s16 = int_to_ptr.hbm [resolvable:$true] %s15
      %s17 = sshll.u32 [#allocation2], 4
      %s18 = int_to_ptr.vmem [resolvable:$true] %s17
      %20 = dma.hbm_to_vmem [thread:$0]  %s16, 128, %s18, [#allocation3]
    $region5: #{tpu_custom_call.1} parent=1 // pred_fallthru
      _
    // Predicated region
    $region6: #{tpu_custom_call.1} parent=1 // pred_check
      _
    $region7: #{tpu_custom_call.1} parent=1 // pred_check_branch
      %22 = sbr.rel (0) target = $region9
    $region8: #{tpu_custom_call.1} parent=1 // pred_region
      %24 = vsyncadd [#allocation6], 0
      %s25 = sshll.u32 %s1, 4
      %s26 = int_to_ptr.hbm [resolvable:$true] %s25
      %s27 = sshll.u32 [#allocation5], 4
      %s28 = int_to_ptr.vmem [resolvable:$true] %s27
      %33 = dma.hbm_to_vmem [thread:$0]  %s26, 768, %s28, [#allocation6], 384, 384, 24
    $region9: #{tpu_custom_call.1} parent=1 // pred_fallthru
      _
    // Predicated region
    $region10: #{tpu_custom_call.1} parent=1 // pred_check
      _
    $region11: #{tpu_custom_call.1} parent=1 // pred_check_branch
      %35 = sbr.rel (0) target = $region13
    $region12: #{tpu_custom_call.1} parent=1 // pred_region
      %37 = dma.done [#allocation3], 128
    $region13: #{tpu_custom_call.1} parent=1 // pred_fallthru
      _
    // Predicated region
    $region14: #{tpu_custom_call.1} parent=1 // pred_check
      _
    $region15: #{tpu_custom_call.1} parent=1 // pred_check_branch
      %39 = sbr.rel (0) target = $region17
    $region16: #{tpu_custom_call.1} parent=1 // pred_region
      %41 = dma.done [#allocation6], 768
    $region17: #{tpu_custom_call.1} parent=1 // pred_fallthru
      _
    %v42 = vld [vmem:[#allocation2] sm:$0xff]
    %v43 = vld [vmem:[#allocation5] sm:$0xff]
    %v44 = vld [vmem:[#allocation5 + $0x8] sm:$0xff]
    %v45 = vld [vmem:[#allocation5 + $0x10] sm:$0xff]
    %v46 = vld [vmem:[#allocation5 + $0x18] sm:$0xff]
    %v47 = vld [vmem:[#allocation5 + $0x20] sm:$0xff]
    %v48 = vld [vmem:[#allocation5 + $0x28] sm:$0xff]
    %vm49 = vcmask 130048
    %v51 = vsel %vm49, %v42, 0
    %53 = vmatpush.msra.mxu0 0.0
    %54 = vmatpush.msra.mxu0 0.0
    %55 = vmatpush.msra.mxu0 0.0
    %56 = vmatpush.msra.mxu0 0.0
    %57 = vmatpush.msra.mxu0 0.0
    %58 = vmatpush.msra.mxu0 0.0
    %59 = vmatpush.msra.mxu0 0.0
    %60 = vmatpush.msra.mxu0 0.0
    %61 = vmatpush.msra.mxu0 0.0
    %62 = vmatpush.msra.mxu0 0.0
    %63 = vmatpush.msra.mxu0 0.0
    %64 = vmatpush.msra.mxu0 0.0
    %65 = vmatpush.msra.mxu0 0.0
    %66 = vmatpush.msra.mxu0 0.0
    %67 = vmatpush.msra.mxu0 %v46
    %68 = vmatpush.msra.mxu0 %v43
    %69 = vmatmul.f32.gmra.mxu0 %v51
    %v70 = vpop.f32.mrf.mxu0
    %v71 = vadd.f32 0.0, %v70
    %72 = vdwg.mxu0
    %73 = vmatpush.msra.mxu0 0.0
    %74 = vmatpush.msra.mxu0 0.0
    %75 = vmatpush.msra.mxu0 0.0
    %76 = vmatpush.msra.mxu0 0.0
    %77 = vmatpush.msra.mxu0 0.0
    %78 = vmatpush.msra.mxu0 0.0
    %79 = vmatpush.msra.mxu0 0.0
    %80 = vmatpush.msra.mxu0 0.0
    %81 = vmatpush.msra.mxu0 0.0
    %82 = vmatpush.msra.mxu0 0.0
    %83 = vmatpush.msra.mxu0 0.0
    %84 = vmatpush.msra.mxu0 0.0
    %85 = vmatpush.msra.mxu0 0.0
    %86 = vmatpush.msra.mxu0 0.0
    %87 = vmatpush.msra.mxu0 %v47
    %88 = vmatpush.msra.mxu0 %v44
    %89 = vmatmul.f32.gmra.mxu0 %v51
    %v90 = vpop.f32.mrf.mxu0
    %v91 = vadd.f32 0.0, %v90
    %92 = vdwg.mxu0
    %93 = vmatpush.msra.mxu0 0.0
    %94 = vmatpush.msra.mxu0 0.0
    %95 = vmatpush.msra.mxu0 0.0
    %96 = vmatpush.msra.mxu0 0.0
    %97 = vmatpush.msra.mxu0 0.0
    %98 = vmatpush.msra.mxu0 0.0
    %99 = vmatpush.msra.mxu0 0.0
    %100 = vmatpush.msra.mxu0 0.0
    %101 = vmatpush.msra.mxu0 0.0
    %102 = vmatpush.msra.mxu0 0.0
    %103 = vmatpush.msra.mxu0 0.0
    %104 = vmatpush.msra.mxu0 0.0
    %105 = vmatpush.msra.mxu0 0.0
    %106 = vmatpush.msra.mxu0 0.0
    %107 = vmatpush.msra.mxu0 %v48
    %108 = vmatpush.msra.mxu0 %v45
    %109 = vmatmul.f32.gmra.mxu0 %v51
    %v110 = vpop.f32.mrf.mxu0
    %v111 = vadd.f32 0.0, %v110
    %112 = vdwg.mxu0
    %v113 = vmul.f32 %v71, 0.17677669
    %114 = vmatpush.xpose.msra.mxu0 0.0
    %115 = vmatpush.xpose.msra.mxu0 0.0
    %116 = vmatpush.xpose.msra.mxu0 0.0
    %117 = vmatpush.xpose.msra.mxu0 0.0
    %118 = vmatpush.xpose.msra.mxu0 0.0
    %119 = vmatpush.xpose.msra.mxu0 0.0
    %120 = vmatpush.xpose.msra.mxu0 0.0
    %121 = vmatpush.xpose.msra.mxu0 0.0
    %122 = vmatpush.xpose.msra.mxu0 0.0
    %123 = vmatpush.xpose.msra.mxu0 0.0
    %124 = vmatpush.xpose.msra.mxu0 0.0
    %125 = vmatpush.xpose.msra.mxu0 0.0
    %126 = vmatpush.xpose.msra.mxu0 0.0
    %127 = vmatpush.xpose.msra.mxu0 0.0
    %128 = vmatpush.xpose.msra.mxu0 0.0
    %129 = vmatpush.xpose.msra.mxu0 %v91
    %130 = vmatmul.f32.gmra.mxu0 %v113
    %v131 = vpop.f32.mrf.mxu0
    %v132 = vadd.f32 0.0, %v131
    %133 = vdwg.mxu0
    %vm134 = vcmask 64512
    %v135 = vsel %vm134, %v132, -inf
    %136 = vmax.xlane.f32.xlu0 %v135
    %v137 = vpop.xlane.xlu0 %136
    %v138 = vsub.f32 %v132, %v137
    %v139 = vmul.f32 %v138, 1.442695
    %v140 = vpow.pop %v139
    %v141 = vsel %vm134, %v140, 0.0
    %142 = vadd.xlane.f32.xlu0 %v141
    %v143 = vpop.xlane.xlu0 %142
    %v144 = vrcp.pop %v143
    %v145 = vmul.f32 %v143, %v144
    %v146 = vsub.f32 2.0, %v145
    %v147 = vmul.f32 %v144, %v146
    %v148 = vmul.f32 %v140, %v147
    %v150 = vsel %vm134, %v148, 0
    %152 = vmatpush.msra.mxu0 0.0
    %153 = vmatpush.msra.mxu0 0.0
    %154 = vmatpush.msra.mxu0 0.0
    %155 = vmatpush.msra.mxu0 0.0
    %156 = vmatpush.msra.mxu0 0.0
    %157 = vmatpush.msra.mxu0 0.0
    %158 = vmatpush.msra.mxu0 0.0
    %159 = vmatpush.msra.mxu0 0.0
    %160 = vmatpush.msra.mxu0 0.0
    %161 = vmatpush.msra.mxu0 0.0
    %162 = vmatpush.msra.mxu0 0.0
    %163 = vmatpush.msra.mxu0 0.0
    %164 = vmatpush.msra.mxu0 0.0
    %165 = vmatpush.msra.mxu0 0.0
    %166 = vmatpush.msra.mxu0 0.0
    %167 = vmatpush.msra.mxu0 %v111
    %168 = vmatmul.f32.gmra.mxu0 %v150
    %v169 = vpop.f32.mrf.mxu0
    %v170 = vadd.f32 0.0, %v169
    %171 = vdwg.mxu0
    %172 = vst [vmem:[#allocation7] sm:$0xff] %v170
    // Predicated region
    $region18: #{tpu_custom_call.1} parent=1 // pred_check
      _
    $region19: #{tpu_custom_call.1} parent=1 // pred_check_branch
      %174 = sbr.rel (0) target = $region21
    $region20: #{tpu_custom_call.1} parent=1 // pred_region
      %176 = vsyncadd [#allocation4], 0
      %s178 = sshll.u32 [#allocation7], 4
      %s179 = int_to_ptr.vmem [resolvable:$true] %s178
      %s180 = sshll.u32 %s2, 4
      %s181 = int_to_ptr.hbm [resolvable:$true] %s180
      %183 = dma.vmem_to_hbm [thread:$0]  %s179, 128, %s181, [#allocation4]
    $region21: #{tpu_custom_call.1} parent=1 // pred_fallthru
      _
    // Predicated region
    $region22: #{tpu_custom_call.1} parent=1 // pred_check
      _
    $region23: #{tpu_custom_call.1} parent=1 // pred_check_branch
      %185 = sbr.rel (0) target = $region25
    $region24: #{tpu_custom_call.1} parent=1 // pred_region
      %187 = dma.done [#allocation4], 128
    $region25: #{tpu_custom_call.1} parent=1 // pred_fallthru
      _
    %188 = vsyncpa [#allocation3], 1
    %189 = vsyncpa [#allocation6], 1
    %190 = vsyncpa [#allocation4], 1

</llo_original>
